<compile_context>
chip_gen: v6e
topology: v6e:2x2x1
jax: 0.10.0
libtpu: 0.0.40
codegen_flags: <defaults>
</compile_context>

<pallas_src>
from functools import partial

import jax
import jax.numpy as jnp
from jax.experimental import pallas as pl
from jax.experimental.pallas import tpu as pltpu


# --------------------------------------------------------------------------- #
# Kernels
# --------------------------------------------------------------------------- #

def _fused_small_kernel(g_ref, b_ref, x_ref, o_ref, *, inv_n, inv_nm1, eps):
    """Whole-array fast path: stats + apply with x resident in VMEM.

    g_ref/b_ref: (C, 1) f32;  x_ref/o_ref: (N, C, S).
    """
    x = x_ref[...].astype(jnp.float32)                               # (N, C, S)
    s = jnp.sum(jnp.sum(x, axis=2, keepdims=True), axis=0, keepdims=True)
    mean = s * inv_n                                                 # (1, C, 1)
    d = x - mean
    var = jnp.sum(jnp.sum(d * d, axis=2, keepdims=True), axis=0,
                  keepdims=True) * inv_nm1                           # (1, C, 1)
    std = jnp.sqrt(jnp.maximum(var, 0.0))
    # eps is added to std (NOT var) to match the PyTorch reference.
    scale = g_ref[...][None] / (std + eps)                           # (1, C, 1)
    shift = b_ref[...][None] - mean * scale
    o_ref[...] = (x * scale + shift).astype(o_ref.dtype)


def _stats_kernel(x_ref, sum_ref, sq_ref, *, s_total, ragged):
    """Partial per-channel sum / sum-of-squares over one (bN, C2, tS) tile.

    sum_ref/sq_ref: (1, C2, 1) f32 partials resident across the spatial
    (reduction) grid axis; one partial row per leading grid index so the
    leading axis can be sharded across TensorCores (v7x megacore).
    """
    ss = pl.program_id(1)

    @pl.when(ss == 0)
    def _init():
        sum_ref[...] = jnp.zeros_like(sum_ref)
        sq_ref[...] = jnp.zeros_like(sq_ref)

    x = x_ref[...].astype(jnp.float32)                               # (bN, C2, tS)
    if ragged:  # mask lanes past the true spatial extent (OOB reads are garbage)
        t_s = x.shape[-1]
        lane = jax.lax.broadcasted_iota(jnp.int32, x.shape, x.ndim - 1)
        x = jnp.where(lane < (s_total - ss * t_s), x, 0.0)
    sum_ref[...] += jnp.sum(jnp.sum(x, axis=2, keepdims=True), axis=0,
                            keepdims=True)
    sq_ref[...] += jnp.sum(jnp.sum(x * x, axis=2, keepdims=True), axis=0,
                           keepdims=True)


def _apply_kernel(scale_ref, shift_ref, x_ref, o_ref):
    """out = x * scale + shift for one (bN, C2, tS) tile (pure mul+add stream).

    scale/shift are precomputed per channel in the wrapper (sqrt/divide hoisted
    out of this hot pass).  Ragged-edge writes are masked by the pipeline.
    """
    x = x_ref[...].astype(jnp.float32)
    o_ref[...] = (x * scale_ref[...] + shift_ref[...]).astype(o_ref.dtype)


# --------------------------------------------------------------------------- #
# Wrapper helpers
# --------------------------------------------------------------------------- #

def _vmem_limit_bytes():
    """Generation-aware VMEM limit: ~3/4 of physical, clamped to [32, 96] MiB."""
    try:
        cap = int(pltpu.get_tpu_info().vmem_capacity_bytes)
        return max(32 << 20, min(96 << 20, (cap * 3) // 4))
    except Exception:
        return 48 << 20                    # safe on v5e / v6e / v7x


def _sublane_fold(C, S, itemsize):
    """Pick k so the packed channel axis C*k fills the sublane dimension."""
    sub = max(8, 32 // max(itemsize, 1))   # 8 for f32, 16 for bf16, 32 for i8
    if C % sub == 0:
        return 1
    for k in range(2, sub + 1):
        if S % k == 0 and (C * k) % sub == 0 and (S // k) >= 128:
            return k
    return 1


def _pick_tiles(N, C2, S2, itemsize, budget_bytes):
    """Choose (bN, tS, ragged).

    tS is a multiple-of-128 divisor of S2 when one exists, else the full S2 if
    it fits the (dtype-aware) budget, else a capped multiple of 128 with a
    masked ragged edge (avoids giant full-S blocks that blow v7x's 64 MiB VMEM).
    bN is the largest divisor of N keeping one tile under budget (batches
    several images per step when the spatial extent is small).
    """
    max_ts = max(128, budget_bytes // (itemsize * max(C2, 1)))
    tS, ragged = None, False
    t = 128
    while t <= min(S2, max_ts):
        if S2 % t == 0:
            tS = t
        t += 128
    if tS is None:
        if S2 <= max_ts:
            tS = S2                        # full spatial extent (always legal)
        else:
            tS = (max_ts // 128) * 128     # capped; mask the ragged edge
            ragged = (S2 % tS) != 0
    bN = 1
    for cand in range(N, 0, -1):
        if N % cand == 0 and cand * C2 * tS * itemsize <= budget_bytes:
            bN = cand
            break
    return bN, tS, ragged


def _buffered_spec(block_shape, index_map, depth):
    """BlockSpec with deeper pipelining when supported (pass 1 is DMA-bound)."""
    try:
        return pl.BlockSpec(block_shape, index_map, pipeline_mode=pl.Buffered(depth))
    except Exception:                      # older jax without pipeline_mode
        return pl.BlockSpec(block_shape, index_map)


# --------------------------------------------------------------------------- #
# Public entry point
# --------------------------------------------------------------------------- #

def layernorm_conv2d(x, gamma, beta, eps=1e-6, *,
                     tile_budget_bytes=None, fastpath_bytes=2 << 20):
    """LayerNormConv2d forward.  x: (N, C, H, W); gamma/beta: (C,)."""
    N, C, H, W = x.shape
    gamma = jnp.asarray(gamma, jnp.float32).reshape(-1)
    beta = jnp.asarray(beta, jnp.float32).reshape(-1)
    if gamma.shape[0] != C or beta.shape[0] != C:
        raise ValueError(
            "got {}-feature tensor, expected {}".format(C, gamma.shape[0]))

    S = H * W
    R = N * S                              # elements reduced per channel
    itemsize = jnp.dtype(x.dtype).itemsize
    eps = float(eps)
    inv_n = 1.0 / R
    # torch.std is unbiased; R == 1 gives NaN in PyTorch too -> propagate NaN.
    inv_nm1 = 1.0 / (R - 1) if R > 1 else float("nan")

    vmem_limit = _vmem_limit_bytes()

    # ---------------- small-input fast path: one fused resident kernel ------ #
    if N * C * S * itemsize <= fastpath_bytes:
        x3 = x.reshape(N, C, S)
        out3 = pl.pallas_call(
            partial(_fused_small_kernel, inv_n=inv_n, inv_nm1=inv_nm1, eps=eps),
            out_shape=jax.ShapeDtypeStruct((N, C, S), x.dtype),
            compiler_params=pltpu.CompilerParams(vmem_limit_bytes=vmem_limit),
        )(gamma.reshape(C, 1), beta.reshape(C, 1), x3)
        return out3.reshape(N, C, H, W)

    # ---------------- tiled two-pass path ----------------------------------- #
    if tile_budget_bytes is None:
        tile_budget_bytes = max(1 << 20, min(8 << 20, vmem_limit // 6))

    k = _sublane_fold(C, S, itemsize)
    C2, S2 = C * k, S // k
    x3 = x.reshape(N, C2, S2)              # free (contiguous) reshape

    bN, tS, ragged = _pick_tiles(N, C2, S2, itemsize, tile_budget_bytes)
    Gn, Gs = N // bN, pl.cdiv(S2, tS)

    # ---- pass 1: per-batch-row partial channel sums / sums-of-squares ------ #
    part_sum, part_sq = pl.pallas_call(
        partial(_stats_kernel, s_total=S2, ragged=ragged),
        out_shape=(jax.ShapeDtypeStruct((Gn, C2, 1), jnp.float32),
                   jax.ShapeDtypeStruct((Gn, C2, 1), jnp.float32)),
        grid_spec=pltpu.PrefetchScalarGridSpec(
            num_scalar_prefetch=0,
            grid=(Gn, Gs),
            in_specs=[_buffered_spec((bN, C2, tS),
                                     lambda nn, ss: (nn, 0, ss), 3)],
            out_specs=[pl.BlockSpec((1, C2, 1), lambda nn, ss: (nn, 0, 0)),
                       pl.BlockSpec((1, C2, 1), lambda nn, ss: (nn, 0, 0))]),
        compiler_params=pltpu.CompilerParams(
            dimension_semantics=("parallel", "arbitrary"),
            vmem_limit_bytes=vmem_limit),
    )(x3)

    # ---- O(C) wrapper math: reduce partials, build per-channel scale/shift - #
    ch_sum = part_sum.reshape(Gn, C, k).sum(axis=(0, 2))          # (C,)
    ch_sq = part_sq.reshape(Gn, C, k).sum(axis=(0, 2))            # (C,)
    mean = ch_sum * inv_n
    var = jnp.maximum((ch_sq - R * mean * mean) * inv_nm1, 0.0)   # clamp >= 0
    std = jnp.sqrt(var)
    scale = gamma / (std + eps)                                   # eps on std
    shift = beta - mean * scale
    scale2 = jnp.broadcast_to(scale[:, None], (C, k)).reshape(C2, 1)
    shift2 = jnp.broadcast_to(shift[:, None], (C, k)).reshape(C2, 1)

    # ---- pass 2: out = x * scale + shift (fully parallel, lane-dense) ------ #
    # NOTE: input_output_aliases={2: 0} would halve the activation footprint,
    # but forces a defensive copy when x is still live in the caller, so it is
    # intentionally left to the caller to donate x if desired.
    out3 = pl.pallas_call(
        _apply_kernel,
        out_shape=jax.ShapeDtypeStruct((N, C2, S2), x.dtype),
        grid_spec=pltpu.PrefetchScalarGridSpec(
            num_scalar_prefetch=0,
            grid=(Gn, Gs),
            in_specs=[
                pl.BlockSpec((C2, 1), lambda nn, ss: (0, 0)),     # scale
                pl.BlockSpec((C2, 1), lambda nn, ss: (0, 0)),     # shift
                pl.BlockSpec((bN, C2, tS), lambda nn, ss: (nn, 0, ss)),
            ],
            out_specs=pl.BlockSpec((bN, C2, tS), lambda nn, ss: (nn, 0, ss))),
        compiler_params=pltpu.CompilerParams(
            dimension_semantics=("parallel", "parallel"),
            vmem_limit_bytes=vmem_limit),
    )(scale2, shift2, x3)

    return out3.reshape(N, C, H, W)


# --------------------------------------------------------------------------- #
# Test
# --------------------------------------------------------------------------- #

def _reference(x, gamma, beta, eps):
    """Pure-JAX mirror of the PyTorch forward (unbiased std, eps on std)."""
    N, C, H, W = x.shape
    xf = jnp.transpose(x, (0, 2, 3, 1)).reshape(-1, C).astype(jnp.float32)
    mean = xf.mean(axis=0)
    std = jnp.sqrt(((xf - mean) ** 2).sum(axis=0) / (xf.shape[0] - 1))
    y = (gamma[None, :, None, None]
         * (x.astype(jnp.float32) - mean[None, :, None, None])
         / (std[None, :, None, None] + eps)
         + beta[None, :, None, None])
    return y.astype(x.dtype)


if __name__ == "__main__":
    key = jax.random.PRNGKey(0)
    k1, k2, k3, k4, k5 = jax.random.split(key, 5)
    ok = True

    # 1) module-sized example -> fused small-input fast path
    x = jax.random.normal(k1, (2, 4, 16, 16), dtype=jnp.float32)
    gamma = jnp.ones((4,), jnp.float32)     # nn.Parameter(torch.ones(C))
    beta = jnp.zeros((4,), jnp.float32)     # nn.Parameter(torch.zeros(C))
    y = layernorm_conv2d(x, gamma, beta, eps=1e-6)
    jax.block_until_ready(y)
    ok &= bool(y.shape == x.shape and y.dtype == x.dtype)
    ok &= bool(jnp.allclose(y, _reference(x, gamma, beta, 1e-6),
                            atol=1e-5, rtol=1e-5))

    # 2) tiled two-pass path: sublane folding (C=4 -> 8) + ragged spatial edge
    x2 = jax.random.normal(k2, (2, 4, 18, 18), dtype=jnp.float32)
    g2 = 1.0 + 0.1 * jax.random.normal(k3, (4,), dtype=jnp.float32)
    b2 = 0.05 * jax.random.normal(k4, (4,), dtype=jnp.float32)
    y2 = layernorm_conv2d(x2, g2, b2, eps=1e-6,
                          tile_budget_bytes=4096, fastpath_bytes=0)
    jax.block_until_ready(y2)
    ok &= bool(jnp.allclose(y2, _reference(x2, g2, b2, 1e-6),
                            atol=1e-5, rtol=1e-5))

    # 3) tiled path with several batch rows per tile (bN > 1)
    x3_ = jax.random.normal(k5, (4, 8, 8, 16), dtype=jnp.float32)
    g3 = jnp.ones((8,), jnp.float32)
    b3 = jnp.zeros((8,), jnp.float32)
    y3 = layernorm_conv2d(x3_, g3, b3, eps=1e-6,
                          tile_budget_bytes=64 * 1024, fastpath_bytes=0)
    jax.block_until_ready(y3)
    ok &= bool(jnp.allclose(y3, _reference(x3_, g3, b3, 1e-6),
                            atol=1e-5, rtol=1e-5))

    if not ok:
        raise SystemExit("mismatch vs reference")
    print("KERNEL_OK")
</pallas_src>

<mosaic_0001>
module attributes {stable_mosaic.version = 11 : i64} {
  func.func @_fused_small_kernel(%arg0: memref<4x1xf32, #tpu.memory_space<vmem>>, %arg1: memref<4x1xf32, #tpu.memory_space<vmem>>, %arg2: memref<2x4x256xf32, #tpu.memory_space<vmem>>, %arg3: memref<2x4x256xf32, #tpu.memory_space<vmem>>) attributes {dimension_semantics = [], scalar_prefetch = 0 : i64, scratch_operands = 0 : i64, tpu.core_type = #tpu.core_type<tc>} {
    %c0 = arith.constant 0 : index
    %c0_0 = arith.constant 0 : index
    %c0_1 = arith.constant 0 : index
    %0 = vector.load %arg2[%c0, %c0_0, %c0_1] : memref<2x4x256xf32, #tpu.memory_space<vmem>>, vector<2x4x256xf32>
    %cst = arith.constant dense<0.000000e+00> : vector<2x4xf32>
    %1 = vector.multi_reduction <add>, %0, %cst [2] : vector<2x4x256xf32> to vector<2x4xf32>
    %2 = vector.shape_cast %1 : vector<2x4xf32> to vector<2x4x1xf32>
    %cst_2 = arith.constant dense<0.000000e+00> : vector<4x1xf32>
    %3 = vector.multi_reduction <add>, %2, %cst_2 [0] : vector<2x4x1xf32> to vector<4x1xf32>
    %4 = vector.shape_cast %3 : vector<4x1xf32> to vector<1x4x1xf32>
    %cst_3 = arith.constant 0.001953125 : f32
    %5 = vector.broadcast %cst_3 : f32 to vector<1x4x1xf32>
    %6 = arith.mulf %4, %5 : vector<1x4x1xf32>
    %7 = vector.broadcast %6 : vector<1x4x1xf32> to vector<2x4x256xf32>
    %8 = arith.subf %0, %7 : vector<2x4x256xf32>
    %9 = arith.mulf %8, %8 : vector<2x4x256xf32>
    %cst_4 = arith.constant dense<0.000000e+00> : vector<2x4xf32>
    %10 = vector.multi_reduction <add>, %9, %cst_4 [2] : vector<2x4x256xf32> to vector<2x4xf32>
    %11 = vector.shape_cast %10 : vector<2x4xf32> to vector<2x4x1xf32>
    %cst_5 = arith.constant dense<0.000000e+00> : vector<4x1xf32>
    %12 = vector.multi_reduction <add>, %11, %cst_5 [0] : vector<2x4x1xf32> to vector<4x1xf32>
    %13 = vector.shape_cast %12 : vector<4x1xf32> to vector<1x4x1xf32>
    %cst_6 = arith.constant 0.00195694715 : f32
    %14 = vector.broadcast %cst_6 : f32 to vector<1x4x1xf32>
    %15 = arith.mulf %13, %14 : vector<1x4x1xf32>
    %cst_7 = arith.constant 0.000000e+00 : f32
    %16 = vector.broadcast %cst_7 : f32 to vector<1x4x1xf32>
    %17 = arith.maximumf %15, %16 : vector<1x4x1xf32>
    %18 = math.sqrt %17 : vector<1x4x1xf32>
    %c0_8 = arith.constant 0 : index
    %c0_9 = arith.constant 0 : index
    %19 = vector.load %arg0[%c0_8, %c0_9] : memref<4x1xf32, #tpu.memory_space<vmem>>, vector<4x1xf32>
    %20 = vector.shape_cast %19 : vector<4x1xf32> to vector<1x4x1xf32>
    %cst_10 = arith.constant 9.99999997E-7 : f32
    %21 = vector.broadcast %cst_10 : f32 to vector<1x4x1xf32>
    %22 = arith.addf %18, %21 : vector<1x4x1xf32>
    %23 = arith.divf %20, %22 : vector<1x4x1xf32>
    %c0_11 = arith.constant 0 : index
    %c0_12 = arith.constant 0 : index
    %24 = vector.load %arg1[%c0_11, %c0_12] : memref<4x1xf32, #tpu.memory_space<vmem>>, vector<4x1xf32>
    %25 = vector.shape_cast %24 : vector<4x1xf32> to vector<1x4x1xf32>
    %26 = arith.mulf %6, %23 : vector<1x4x1xf32>
    %27 = arith.subf %25, %26 : vector<1x4x1xf32>
    %28 = vector.broadcast %23 : vector<1x4x1xf32> to vector<2x4x256xf32>
    %29 = arith.mulf %0, %28 : vector<2x4x256xf32>
    %30 = vector.broadcast %27 : vector<1x4x1xf32> to vector<2x4x256xf32>
    %31 = arith.addf %29, %30 : vector<2x4x256xf32>
    %c0_13 = arith.constant 0 : index
    %c0_14 = arith.constant 0 : index
    %c0_15 = arith.constant 0 : index
    %32 = vector.load %arg3[%c0_13, %c0_14, %c0_15] : memref<2x4x256xf32, #tpu.memory_space<vmem>>, vector<2x4x256xf32>
    tpu.vector_store %arg3[%c0_13, %c0_14, %c0_15], %31 {strides = array<i32>} : memref<2x4x256xf32, #tpu.memory_space<vmem>>, vector<2x4x256xf32>,
    return
  }
}

</mosaic_0001>

<llo_original>
// kernel: tpu_custom_call.1
$region0: #{tpu_custom_call.1}
  #allocation0 [shape = 'u32[]', space=smem, size = 0x4, offset = 0x4, fixed_abs, tag = 'smem constant byte address 0x4 - core index']
  #allocation1 [shape = 'u32[144,128]{1,0:T(1,128)}', space=vmem, size = 0x12000, scoped, tag = 'internal scratch']
  %s0 = inlined_call_operand.vmem [shape: f32[4,1], index: 0, kind: input, shape index: {}]
  %s1 = inlined_call_operand.vmem [shape: f32[4,1], index: 1, kind: input, shape index: {}]
  %s2 = inlined_call_operand.hbm [shape: f32[2,4,256], index: 2, kind: input, shape index: {}]
  %s3 = inlined_call_operand.hbm [shape: f32[2,4,256], index: 3, kind: output, shape index: {}]
  %s4 = sld [smem:[#allocation0]]
  $region26: #{tpu_custom_call.1} parent=0
    _
  %s6 = ssub.s32 1, %s4
  %s7 = scalar_select 0, %s6, %s4
  $region1: #{tpu_custom_call.1} parent=0
    #allocation2 [shape = 'u8[8192]{0}', space=vmem, size = 0x2000, scoped, tag = 'input window, operand 2, single buffered']
    #allocation3 [shape = 's32[1]{0}', space=sflag, size = 0x4, scoped, tag = 'scoped memory for tpu_custom_call.1']
    #allocation4 [shape = 's32[1]{0}', space=sflag, size = 0x4, scoped, tag = 'scoped memory for tpu_custom_call.1']
    #allocation5 [shape = 'u8[8192]{0}', space=vmem, size = 0x2000, scoped, tag = 'output window, operand 0, single buffered']
    %8 = vsyncpa [#allocation3], 0
    %9 = vsyncpa [#allocation4], 0
    // Predicated region
    $region2: #{tpu_custom_call.1} parent=1 // pred_check
      _
    $region3: #{tpu_custom_call.1} parent=1 // pred_check_branch
      %11 = sbr.rel (0) target = $region5
    $region4: #{tpu_custom_call.1} parent=1 // pred_region
      _
    $region5: #{tpu_custom_call.1} parent=1 // pred_fallthru
      _
    // Predicated region
    $region6: #{tpu_custom_call.1} parent=1 // pred_check
      _
    $region7: #{tpu_custom_call.1} parent=1 // pred_check_branch
      %13 = sbr.rel (0) target = $region9
    $region8: #{tpu_custom_call.1} parent=1 // pred_region
      _
    $region9: #{tpu_custom_call.1} parent=1 // pred_fallthru
      _
    // Predicated region
    $region10: #{tpu_custom_call.1} parent=1 // pred_check
      _
    $region11: #{tpu_custom_call.1} parent=1 // pred_check_branch
      %15 = sbr.rel (0) target = $region13
    $region12: #{tpu_custom_call.1} parent=1 // pred_region
      %s17 = ssub.s32 256, 256
      %18 = vsyncadd [#allocation3], %s17
      %s19 = sshll.u32 [#allocation2], 4
      %s20 = int_to_ptr.vmem [resolvable:$true] %s19
      %25 = dma.hbm_to_vmem [thread:$0]  %s2, 256, %s20, [#allocation3], 128, 128, 8
    $region13: #{tpu_custom_call.1} parent=1 // pred_fallthru
      _
    // Predicated region
    $region14: #{tpu_custom_call.1} parent=1 // pred_check
      _
    $region15: #{tpu_custom_call.1} parent=1 // pred_check_branch
      %27 = sbr.rel (0) target = $region17
    $region16: #{tpu_custom_call.1} parent=1 // pred_region
      %28 = dma.done [#allocation3], 256
    $region17: #{tpu_custom_call.1} parent=1 // pred_fallthru
      _
    %v29 = vld [vmem:[#allocation2] sm:$0xff]
    %v30 = vld [vmem:[#allocation2 + $0x8] sm:$0xff]
    %v33 = vcombine.high %v29, %v29
    %v34 = vcombine.high %v30, %v30
    %vm37 = vcmask 1043456
    %v38 = vsel %vm37, %v29, 0.0
    %v39 = vsel %vm37, %v33, 0.0
    %v40 = vadd.f32 %v38, %v39
    %41 = vadd.xlane.f32.xlu0 %v40
    %v42 = vpop.xlane.xlu0 %41
    %v43 = vsel %vm37, %v30, 0.0
    %v44 = vsel %vm37, %v34, 0.0
    %v45 = vadd.f32 %v43, %v44
    %46 = vadd.xlane.f32.xlu0 %v45
    %v47 = vpop.xlane.xlu0 %46
    %v48 = vsel %vm37, %v42, 0.0
    %v49 = vsel %vm37, %v47, 0.0
    %v50 = vadd.f32 %v48, %v49
    %v51 = vmul.f32 %v50, 0.001953125
    %v54 = vunpack.c.l.s4 839922192
    %v55 = vunpack.c.0.s8 %v54
    %v56 = vlaneseq
    %v57 = vshrl.u32 %v56, 7
    %v58 = vsub.s32 %v55, %v57
    %v59 = vrot.slane %v51, %v58
    %v61 = vsub.f32 %v29, %v59
    %v62 = vsub.f32 %v30, %v59
    %v63 = vmul.f32 %v61, %v61
    %v64 = vmul.f32 %v62, %v62
    %v67 = vcombine.high %v63, %v63
    %v68 = vcombine.high %v64, %v64
    %v71 = vsel %vm37, %v63, 0.0
    %v72 = vsel %vm37, %v67, 0.0
    %v73 = vadd.f32 %v71, %v72
    %74 = vadd.xlane.f32.xlu0 %v73
    %v75 = vpop.xlane.xlu0 %74
    %v76 = vsel %vm37, %v64, 0.0
    %v77 = vsel %vm37, %v68, 0.0
    %v78 = vadd.f32 %v76, %v77
    %79 = vadd.xlane.f32.xlu0 %v78
    %v80 = vpop.xlane.xlu0 %79
    %v81 = vsel %vm37, %v75, 0.0
    %v82 = vsel %vm37, %v80, 0.0
    %v83 = vadd.f32 %v81, %v82
    %v84 = vmul.f32 %v83, 0.0019569471
    %v85 = vmax.f32 %v84, 0.0
    %v86 = vrsqrt.pop %v85
    %v87 = vmul.f32 %v85, %v86
    %vm88 = vcmp.eq.f32.partialorder %v85, inf
    %v89 = vsel %vm88, %v85, %v87
    %vm90 = vcmp.eq.f32.partialorder %v85, 0.0
    %v91 = vand.u32 %v85, 2147483648
    %v92 = vsel %vm90, %v91, %v89
    %v93 = vld [vmem:[%s0] sm:$0xf]
    %v94 = vadd.f32 %v92, 1e-06
    %v95 = vrcp.pop %v94
    %v96 = vmul.f32 %v93, %v95
    %v97 = vld [vmem:[%s1] sm:$0xf]
    %v98 = vmul.f32 %v51, %v96
    %v99 = vsub.f32 %v97, %v98
    %101 = vset.pattern.permute.xlu0 0
    %102 = vperm.xlu0 %101, %v96
    %v103 = vpop.permute.xlu0 %102
    %v105 = vunpack.c.l.s4 839922192
    %v106 = vunpack.c.0.s8 %v105
    %v107 = vlaneseq
    %v108 = vshrl.u32 %v107, 7
    %v109 = vsub.s32 %v106, %v108
    %v110 = vrot.slane %v103, %v109
    %v112 = vmul.f32 %v29, %v110
    %v113 = vmul.f32 %v30, %v110
    %115 = vset.pattern.permute.xlu0 0
    %116 = vperm.xlu0 %115, %v99
    %v117 = vpop.permute.xlu0 %116
    %v119 = vunpack.c.l.s4 839922192
    %v120 = vunpack.c.0.s8 %v119
    %v121 = vlaneseq
    %v122 = vshrl.u32 %v121, 7
    %v123 = vsub.s32 %v120, %v122
    %v124 = vrot.slane %v117, %v123
    %v126 = vadd.f32 %v112, %v124
    %v127 = vadd.f32 %v113, %v124
    %128 = vst [vmem:[#allocation5] sm:$0xff] %v126
    %129 = vst [vmem:[#allocation5 + $0x8] sm:$0xff] %v127
    // Predicated region
    $region18: #{tpu_custom_call.1} parent=1 // pred_check
      _
    $region19: #{tpu_custom_call.1} parent=1 // pred_check_branch
      %131 = sbr.rel (0) target = $region21
    $region20: #{tpu_custom_call.1} parent=1 // pred_region
      %s133 = ssub.s32 256, 256
      %134 = vsyncadd [#allocation4], %s133
      %s135 = sshll.u32 [#allocation5], 4
      %s136 = int_to_ptr.vmem [resolvable:$true] %s135
      %141 = dma.vmem_to_hbm [thread:$0]  %s136, 256, %s3, [#allocation4], 128, 128, 8
    $region21: #{tpu_custom_call.1} parent=1 // pred_fallthru
      _
    // Predicated region
    $region22: #{tpu_custom_call.1} parent=1 // pred_check
      _
    $region23: #{tpu_custom_call.1} parent=1 // pred_check_branch
      %143 = sbr.rel (0) target = $region25
    $region24: #{tpu_custom_call.1} parent=1 // pred_region
      %144 = dma.done [#allocation4], 256
    $region25: #{tpu_custom_call.1} parent=1 // pred_fallthru
      _
    %145 = vsyncpa [#allocation3], 1
    %146 = vsyncpa [#allocation4], 1

</llo_original>
